<compile_context>
chip_gen: v7x
topology: tpu7x:2x2x1
jax: 0.10.0
libtpu: 0.0.40
codegen_flags: <defaults>
</compile_context>

<pallas_src>
import functools

import jax
import jax.numpy as jnp
from jax import lax
from jax.experimental import pallas as pl
from jax.experimental.pallas import tpu as pltpu

EPS = 1e-5
TARGET_BLOCK_BYTES = 4 * 1024 * 1024       # ~4 MiB activation tiles
VMEM_LIMIT_BYTES = 48 * 1024 * 1024        # fits v7x (64 MiB physical), safe on v5e/v6e


def _pick_hw_tile(hw, c, itemsize):
    """Largest lane-dense (multiple-of-128) divisor of hw keeping C*THW ~<= target."""
    row_bytes = c * itemsize
    if hw * row_bytes <= TARGET_BLOCK_BYTES or hw % 128 != 0:
        return hw
    max_thw = max(128, TARGET_BLOCK_BYTES // row_bytes)
    best = None
    d = 128
    while d <= hw:
        if hw % d == 0:
            if d <= max_thw:
                best = d            # keep the largest divisor under the cap
            elif best is None:
                best = d            # no divisor fits the cap: smallest valid one
        d += 128
    return best if best is not None else hw


def _pick_batch_tile(n, c, thw, itemsize):
    """Fold batch elements into the block until ~target bytes (divisor of N)."""
    block_bytes = c * thw * itemsize
    cap = max(1, TARGET_BLOCK_BYTES // block_bytes)
    tn = 1
    for d in range(1, n + 1):
        if n % d == 0 and d <= cap:
            tn = d
    return tn


def _stats_kernel(x_ref, sum_ref, sumsq_ref):
    # x_ref:     (TN, C, THW)   activation tile (lane axis = H*W, dense)
    # sum_ref:   (1, C, 1)      per-channel sum   partial for this batch block
    # sumsq_ref: (1, C, 1)      per-channel sum(x*x) partial for this batch block
    h = pl.program_id(1)

    @pl.when(h == 0)
    def _():
        sum_ref[...] = jnp.zeros_like(sum_ref)
        sumsq_ref[...] = jnp.zeros_like(sumsq_ref)

    x = x_ref[...].astype(jnp.float32)
    s = jnp.sum(x, axis=2, keepdims=True)          # (TN, C, 1) lane reduce
    sq = jnp.sum(x * x, axis=2, keepdims=True)     # (TN, C, 1)
    sum_ref[...] += jnp.sum(s, axis=0, keepdims=True)
    sumsq_ref[...] += jnp.sum(sq, axis=0, keepdims=True)


def _normalize_kernel(x_ref, scale_ref, shift_ref, o_ref):
    # x_ref: (TN, C, THW); scale_ref/shift_ref: (1, C, 1) folded affine constants.
    x = x_ref[...].astype(jnp.float32)
    y = x * scale_ref[...] + shift_ref[...]        # 1 mul + 1 add per element
    o_ref[...] = y.astype(o_ref.dtype)


def multitask_bn(x_nchw, gammas, betas, task_id):
    """Pallas implementation of MultitaskBN.forward(x, task_id).

    x_nchw : (N, C, H, W)            -- PyTorch NCHW input (f32 or bf16)
    gammas : (num_tasks, C) float32  -- per-task BN weight
    betas  : (num_tasks, C) float32  -- per-task BN bias
    task_id: int                     -- which task's BN to apply
    """
    N, C, H, W = x_nchw.shape
    HW = H * W
    itemsize = jnp.dtype(x_nchw.dtype).itemsize

    # Free reshape (no transpose, no extra HBM traffic): NCHW -> (N, C, H*W).
    x3d = x_nchw.reshape(N, C, HW)

    THW = _pick_hw_tile(HW, C, itemsize)
    TN = _pick_batch_tile(N, C, THW, itemsize)
    grid = (N // TN, HW // THW)

    # ---- Pass 1: per-channel sum / sum-of-squares (f32 accumulators) ----------
    sums, sumsqs = pl.pallas_call(
        _stats_kernel,
        out_shape=(
            jax.ShapeDtypeStruct((grid[0], C, 1), jnp.float32),
            jax.ShapeDtypeStruct((grid[0], C, 1), jnp.float32),
        ),
        grid=grid,
        in_specs=[pl.BlockSpec((TN, C, THW), lambda n, h: (n, 0, h))],
        out_specs=(
            pl.BlockSpec((1, C, 1), lambda n, h: (n, 0, 0)),
            pl.BlockSpec((1, C, 1), lambda n, h: (n, 0, 0)),
        ),
        compiler_params=pltpu.CompilerParams(
            dimension_semantics=("parallel", "arbitrary"),
            vmem_limit_bytes=VMEM_LIMIT_BYTES,
        ),
    )(x3d)

    # ---- Tiny (C,)-sized glue: fold stats + per-task affine into scale/shift --
    count = jnp.float32(N * HW)
    s = jnp.sum(sums, axis=0).reshape(C)
    sq = jnp.sum(sumsqs, axis=0).reshape(C)
    mean = s / count
    var = jnp.maximum(sq / count - mean * mean, 0.0)   # biased variance
    gamma = lax.dynamic_slice_in_dim(gammas, task_id, 1, axis=0).reshape(C)
    beta = lax.dynamic_slice_in_dim(betas, task_id, 1, axis=0).reshape(C)
    scale = gamma.astype(jnp.float32) * lax.rsqrt(var + EPS)
    shift = beta.astype(jnp.float32) - mean * scale
    scale3d = scale.reshape(1, C, 1)
    shift3d = shift.reshape(1, C, 1)

    # ---- Pass 2: normalize, fully parallel grid --------------------------------
    out3d = pl.pallas_call(
        _normalize_kernel,
        out_shape=jax.ShapeDtypeStruct((N, C, HW), x_nchw.dtype),
        grid=grid,
        in_specs=[
            pl.BlockSpec((TN, C, THW), lambda n, h: (n, 0, h)),
            pl.BlockSpec((1, C, 1), lambda n, h: (0, 0, 0)),
            pl.BlockSpec((1, C, 1), lambda n, h: (0, 0, 0)),
        ],
        out_specs=pl.BlockSpec((TN, C, THW), lambda n, h: (n, 0, h)),
        compiler_params=pltpu.CompilerParams(
            dimension_semantics=("parallel", "parallel"),
            vmem_limit_bytes=VMEM_LIMIT_BYTES,
        ),
    )(x3d, scale3d, shift3d)

    # Free reshape back to NCHW.
    return out3d.reshape(N, C, H, W)


def _reference_bn(x_nchw, gammas, betas, task_id):
    """Pure-JAX reference mirroring PyTorch BatchNorm2d (training mode)."""
    x = x_nchw.astype(jnp.float32)
    mean = jnp.mean(x, axis=(0, 2, 3), keepdims=True)
    var = jnp.mean((x - mean) ** 2, axis=(0, 2, 3), keepdims=True)
    g = gammas[task_id].reshape(1, -1, 1, 1)
    b = betas[task_id].reshape(1, -1, 1, 1)
    return g * (x - mean) / jnp.sqrt(var + EPS) + b


if __name__ == "__main__":
    # Small, module-consistent shapes: batch=2, channels=4, spatial=16x16, 3 tasks.
    N, C, H, W = 2, 4, 16, 16
    NUM_TASKS = 3
    TASK_ID = 1

    key = jax.random.PRNGKey(0)
    kx, kg, kb = jax.random.split(key, 3)

    x = jax.random.normal(kx, (N, C, H, W), dtype=jnp.float32)
    # PyTorch default is gamma=1, beta=0; perturb so the affine path is exercised.
    gammas = 1.0 + 0.1 * jax.random.normal(kg, (NUM_TASKS, C), dtype=jnp.float32)
    betas = 0.1 * jax.random.normal(kb, (NUM_TASKS, C), dtype=jnp.float32)

    run = jax.jit(functools.partial(multitask_bn, task_id=TASK_ID))
    out = run(x, gammas, betas)
    out = jax.block_until_ready(out)

    ref = _reference_bn(x, gammas, betas, TASK_ID)
    assert out.shape == (N, C, H, W)
    assert jnp.allclose(out, ref, atol=1e-4, rtol=1e-4), "mismatch vs reference"

    print("KERNEL_OK")
</pallas_src>

<mosaic_0001>
module attributes {stable_mosaic.version = 11 : i64} {
  func.func @_stats_kernel(%arg0: i32, %arg1: i32, %arg2: memref<2x4x256xf32, #tpu.memory_space<vmem>>, %arg3: memref<1x4x1xf32, #tpu.memory_space<vmem>>, %arg4: memref<1x4x1xf32, #tpu.memory_space<vmem>>) attributes {dimension_semantics = [#tpu.dimension_semantics<parallel>, #tpu.dimension_semantics<arbitrary>], iteration_bounds = array<i64: 1, 1>, scalar_prefetch = 0 : i64, scratch_operands = 0 : i64, tpu.core_type = #tpu.core_type<tc>, window_params = [{transform_indices = @transform_0, window_bounds = array<i64: 2, 4, 256>}, {transform_indices = @transform_1, window_bounds = array<i64: 1, 4, 1>}, {transform_indices = @transform_2, window_bounds = array<i64: 1, 4, 1>}]} {
    %c0_i32 = arith.constant 0 : i32
    %0 = arith.cmpi eq, %arg1, %c0_i32 : i32
    %1 = arith.extui %0 : i1 to i32
    %c0_i32_0 = arith.constant 0 : i32
    %2 = arith.cmpi ne, %1, %c0_i32_0 : i32
    scf.if %2 {
      %cst_18 = arith.constant 0.000000e+00 : f32
      %19 = vector.broadcast %cst_18 : f32 to vector<1x4x1xf32>
      %c0_19 = arith.constant 0 : index
      %c0_20 = arith.constant 0 : index
      %c0_21 = arith.constant 0 : index
      %20 = vector.load %arg3[%c0_19, %c0_20, %c0_21] : memref<1x4x1xf32, #tpu.memory_space<vmem>>, vector<1x4x1xf32>
      tpu.vector_store %arg3[%c0_19, %c0_20, %c0_21], %19 {strides = array<i32>} : memref<1x4x1xf32, #tpu.memory_space<vmem>>, vector<1x4x1xf32>,
      %cst_22 = arith.constant 0.000000e+00 : f32
      %21 = vector.broadcast %cst_22 : f32 to vector<1x4x1xf32>
      %c0_23 = arith.constant 0 : index
      %c0_24 = arith.constant 0 : index
      %c0_25 = arith.constant 0 : index
      %22 = vector.load %arg4[%c0_23, %c0_24, %c0_25] : memref<1x4x1xf32, #tpu.memory_space<vmem>>, vector<1x4x1xf32>
      tpu.vector_store %arg4[%c0_23, %c0_24, %c0_25], %21 {strides = array<i32>} : memref<1x4x1xf32, #tpu.memory_space<vmem>>, vector<1x4x1xf32>,
    } else {
    }
    %c0 = arith.constant 0 : index
    %c0_1 = arith.constant 0 : index
    %c0_2 = arith.constant 0 : index
    %3 = vector.load %arg2[%c0, %c0_1, %c0_2] : memref<2x4x256xf32, #tpu.memory_space<vmem>>, vector<2x4x256xf32>
    %cst = arith.constant dense<0.000000e+00> : vector<2x4xf32>
    %4 = vector.multi_reduction <add>, %3, %cst [2] : vector<2x4x256xf32> to vector<2x4xf32>
    %5 = vector.shape_cast %4 : vector<2x4xf32> to vector<2x4x1xf32>
    %6 = arith.mulf %3, %3 : vector<2x4x256xf32>
    %cst_3 = arith.constant dense<0.000000e+00> : vector<2x4xf32>
    %7 = vector.multi_reduction <add>, %6, %cst_3 [2] : vector<2x4x256xf32> to vector<2x4xf32>
    %8 = vector.shape_cast %7 : vector<2x4xf32> to vector<2x4x1xf32>
    %c0_4 = arith.constant 0 : index
    %c0_5 = arith.constant 0 : index
    %c0_6 = arith.constant 0 : index
    %9 = vector.load %arg3[%c0_4, %c0_5, %c0_6] : memref<1x4x1xf32, #tpu.memory_space<vmem>>, vector<1x4x1xf32>
    %cst_7 = arith.constant dense<0.000000e+00> : vector<4x1xf32>
    %10 = vector.multi_reduction <add>, %5, %cst_7 [0] : vector<2x4x1xf32> to vector<4x1xf32>
    %11 = vector.shape_cast %10 : vector<4x1xf32> to vector<1x4x1xf32>
    %12 = arith.addf %9, %11 : vector<1x4x1xf32>
    %c0_8 = arith.constant 0 : index
    %c0_9 = arith.constant 0 : index
    %c0_10 = arith.constant 0 : index
    %13 = vector.load %arg3[%c0_8, %c0_9, %c0_10] : memref<1x4x1xf32, #tpu.memory_space<vmem>>, vector<1x4x1xf32>
    tpu.vector_store %arg3[%c0_8, %c0_9, %c0_10], %12 {strides = array<i32>} : memref<1x4x1xf32, #tpu.memory_space<vmem>>, vector<1x4x1xf32>,
    %c0_11 = arith.constant 0 : index
    %c0_12 = arith.constant 0 : index
    %c0_13 = arith.constant 0 : index
    %14 = vector.load %arg4[%c0_11, %c0_12, %c0_13] : memref<1x4x1xf32, #tpu.memory_space<vmem>>, vector<1x4x1xf32>
    %cst_14 = arith.constant dense<0.000000e+00> : vector<4x1xf32>
    %15 = vector.multi_reduction <add>, %8, %cst_14 [0] : vector<2x4x1xf32> to vector<4x1xf32>
    %16 = vector.shape_cast %15 : vector<4x1xf32> to vector<1x4x1xf32>
    %17 = arith.addf %14, %16 : vector<1x4x1xf32>
    %c0_15 = arith.constant 0 : index
    %c0_16 = arith.constant 0 : index
    %c0_17 = arith.constant 0 : index
    %18 = vector.load %arg4[%c0_15, %c0_16, %c0_17] : memref<1x4x1xf32, #tpu.memory_space<vmem>>, vector<1x4x1xf32>
    tpu.vector_store %arg4[%c0_15, %c0_16, %c0_17], %17 {strides = array<i32>} : memref<1x4x1xf32, #tpu.memory_space<vmem>>, vector<1x4x1xf32>,
    return
  }
  func.func @transform_0(%arg0: i32, %arg1: i32) -> (i32, i32, i32) {
    %c0_i32 = arith.constant 0 : i32
    %c0_i32_0 = arith.constant 0 : i32
    return %arg0, %c0_i32, %arg1 : i32, i32, i32
  }
  func.func @transform_1(%arg0: i32, %arg1: i32) -> (i32, i32, i32) {
    %c0_i32 = arith.constant 0 : i32
    %c0_i32_0 = arith.constant 0 : i32
    %c0_i32_1 = arith.constant 0 : i32
    return %arg0, %c0_i32, %c0_i32_0 : i32, i32, i32
  }
  func.func @transform_2(%arg0: i32, %arg1: i32) -> (i32, i32, i32) {
    %c0_i32 = arith.constant 0 : i32
    %c0_i32_0 = arith.constant 0 : i32
    %c0_i32_1 = arith.constant 0 : i32
    return %arg0, %c0_i32, %c0_i32_0 : i32, i32, i32
  }
}

module attributes {stable_mosaic.version = 11 : i64} {
  func.func @_normalize_kernel(%arg0: i32, %arg1: i32, %arg2: memref<2x4x256xf32, #tpu.memory_space<vmem>>, %arg3: memref<1x4x1xf32, #tpu.memory_space<vmem>>, %arg4: memref<1x4x1xf32, #tpu.memory_space<vmem>>, %arg5: memref<2x4x256xf32, #tpu.memory_space<vmem>>) attributes {dimension_semantics = [#tpu.dimension_semantics<parallel>, #tpu.dimension_semantics<parallel>], iteration_bounds = array<i64: 1, 1>, scalar_prefetch = 0 : i64, scratch_operands = 0 : i64, tpu.core_type = #tpu.core_type<tc>, window_params = [{transform_indices = @transform_0, window_bounds = array<i64: 2, 4, 256>}, {pipeline_mode = #tpu.pipeline_mode<synchronous>, transform_indices = @transform_1, window_bounds = array<i64: 1, 4, 1>}, {pipeline_mode = #tpu.pipeline_mode<synchronous>, transform_indices = @transform_2, window_bounds = array<i64: 1, 4, 1>}, {transform_indices = @transform_3, window_bounds = array<i64: 2, 4, 256>}]} {
    %c0 = arith.constant 0 : index
    %c0_0 = arith.constant 0 : index
    %c0_1 = arith.constant 0 : index
    %0 = vector.load %arg2[%c0, %c0_0, %c0_1] : memref<2x4x256xf32, #tpu.memory_space<vmem>>, vector<2x4x256xf32>
    %c0_2 = arith.constant 0 : index
    %c0_3 = arith.constant 0 : index
    %c0_4 = arith.constant 0 : index
    %1 = vector.load %arg3[%c0_2, %c0_3, %c0_4] : memref<1x4x1xf32, #tpu.memory_space<vmem>>, vector<1x4x1xf32>
    %2 = vector.broadcast %1 : vector<1x4x1xf32> to vector<2x4x256xf32>
    %3 = arith.mulf %0, %2 : vector<2x4x256xf32>
    %c0_5 = arith.constant 0 : index
    %c0_6 = arith.constant 0 : index
    %c0_7 = arith.constant 0 : index
    %4 = vector.load %arg4[%c0_5, %c0_6, %c0_7] : memref<1x4x1xf32, #tpu.memory_space<vmem>>, vector<1x4x1xf32>
    %5 = vector.broadcast %4 : vector<1x4x1xf32> to vector<2x4x256xf32>
    %6 = arith.addf %3, %5 : vector<2x4x256xf32>
    %c0_8 = arith.constant 0 : index
    %c0_9 = arith.constant 0 : index
    %c0_10 = arith.constant 0 : index
    %7 = vector.load %arg5[%c0_8, %c0_9, %c0_10] : memref<2x4x256xf32, #tpu.memory_space<vmem>>, vector<2x4x256xf32>
    tpu.vector_store %arg5[%c0_8, %c0_9, %c0_10], %6 {strides = array<i32>} : memref<2x4x256xf32, #tpu.memory_space<vmem>>, vector<2x4x256xf32>,
    return
  }
  func.func @transform_0(%arg0: i32, %arg1: i32) -> (i32, i32, i32) {
    %c0_i32 = arith.constant 0 : i32
    %c0_i32_0 = arith.constant 0 : i32
    return %arg0, %c0_i32, %arg1 : i32, i32, i32
  }
  func.func @transform_1(%arg0: i32, %arg1: i32) -> (i32, i32, i32) {
    %c0_i32 = arith.constant 0 : i32
    %c0_i32_0 = arith.constant 0 : i32
    %c0_i32_1 = arith.constant 0 : i32
    %c0_i32_2 = arith.constant 0 : i32
    return %c0_i32, %c0_i32_0, %c0_i32_1 : i32, i32, i32
  }
  func.func @transform_2(%arg0: i32, %arg1: i32) -> (i32, i32, i32) {
    %c0_i32 = arith.constant 0 : i32
    %c0_i32_0 = arith.constant 0 : i32
    %c0_i32_1 = arith.constant 0 : i32
    %c0_i32_2 = arith.constant 0 : i32
    return %c0_i32, %c0_i32_0, %c0_i32_1 : i32, i32, i32
  }
  func.func @transform_3(%arg0: i32, %arg1: i32) -> (i32, i32, i32) {
    %c0_i32 = arith.constant 0 : i32
    %c0_i32_0 = arith.constant 0 : i32
    return %arg0, %c0_i32, %arg1 : i32, i32, i32
  }
}

</mosaic_0001>

<llo_original>
// kernel: multitask_bn.2
$region0: #{multitask_bn.2}
  #allocation0 [shape = 'u32[]', space=smem, size = 0x4, offset = 0x4, fixed_abs, tag = 'smem constant byte address 0x4 - core index']
  #allocation1 [shape = 'u32[144,128]{1,0:T(1,128)}', space=vmem, size = 0x12000, scoped, tag = 'internal scratch']
  %s0 = inlined_call_operand.vmem [shape: f32[2,4,256], index: 0, kind: input, shape index: {}]
  %s1 = inlined_call_operand.vmem [shape: f32[1,4,1], index: 1, kind: output, shape index: {0}]
  %s2 = inlined_call_operand.vmem [shape: f32[1,4,1], index: 2, kind: output, shape index: {1}]
  %3 = xla_tuple %s1, %s2
  %s4 = sld [smem:[#allocation0]]
  $region26: #{multitask_bn.2} parent=0
    _
  %s6 = ssub.s32 1, %s4
  %s7 = scalar_select 0, %s6, %s4
  // Predicated region
  $region2: #{multitask_bn.2} parent=0 // pred_check
    _
  $region3: #{multitask_bn.2} parent=0 // pred_check_branch
    %9 = sbr.rel (0) target = $region5
  $region4: #{multitask_bn.2} parent=0 // pred_region
    _
  $region5: #{multitask_bn.2} parent=0 // pred_fallthru
    _
  %p10 = scmp.eq.s32.totalorder 0, 0
  // Predicated region
  $region6: #{multitask_bn.2} parent=0 // pred_check
    %p11 = pneg %p10
  $region7: #{multitask_bn.2} parent=0 // pred_check_branch
    %13 = sbr.rel (%p11) target = $region9
  $region8: #{multitask_bn.2} parent=0 // pred_region
    %vm14 = vcmask 3072
    %15 = vst.msk [vmem:[%s1] sm:$0xf] %vm14, 0.0
    %16 = vst.msk [vmem:[%s2] sm:$0xf] %vm14, 0.0
  $region9: #{multitask_bn.2} parent=0 // pred_fallthru
    _
  %v17 = vld [vmem:[%s0] sm:$0xff]
  %v18 = vld [vmem:[%s0 + $0x8] sm:$0xff]
  %v21 = vcombine.high %v17, %v17
  %v22 = vcombine.high %v18, %v18
  %vm25 = vcmask 1043456
  %v26 = vsel %vm25, %v17, 0.0
  %v27 = vsel %vm25, %v21, 0.0
  %v28 = vadd.f32 %v26, %v27
  %29 = vadd.xlane.f32.xlu0 %v28
  %v30 = vpop.xlane.xlu0 %29
  %v31 = vsel %vm25, %v18, 0.0
  %v32 = vsel %vm25, %v22, 0.0
  %v33 = vadd.f32 %v31, %v32
  %34 = vadd.xlane.f32.xlu0 %v33
  %v35 = vpop.xlane.xlu0 %34
  %v36 = vmul.f32 %v17, %v17
  %v37 = vmul.f32 %v18, %v18
  %v40 = vcombine.high %v36, %v36
  %v41 = vcombine.high %v37, %v37
  %v44 = vsel %vm25, %v36, 0.0
  %v45 = vsel %vm25, %v40, 0.0
  %v46 = vadd.f32 %v44, %v45
  %47 = vadd.xlane.f32.xlu0 %v46
  %v48 = vpop.xlane.xlu0 %47
  %v49 = vsel %vm25, %v37, 0.0
  %v50 = vsel %vm25, %v41, 0.0
  %v51 = vadd.f32 %v49, %v50
  %52 = vadd.xlane.f32.xlu0 %v51
  %v53 = vpop.xlane.xlu0 %52
  %v54 = vld [vmem:[%s1] sm:$0xf]
  %v55 = vsel %vm25, %v30, 0.0
  %v56 = vsel %vm25, %v35, 0.0
  %v57 = vadd.f32 %v55, %v56
  %v58 = vadd.f32 %v54, %v57
  %vm59 = vcmask 3072
  %60 = vst.msk [vmem:[%s1] sm:$0xf] %vm59, %v58
  %v61 = vld [vmem:[%s2] sm:$0xf]
  %v62 = vsel %vm25, %v48, 0.0
  %v63 = vsel %vm25, %v53, 0.0
  %v64 = vadd.f32 %v62, %v63
  %v65 = vadd.f32 %v61, %v64
  %66 = vst.msk [vmem:[%s2] sm:$0xf] %vm59, %v65
  // Predicated region
  $region10: #{multitask_bn.2} parent=0 // pred_check
    _
  $region11: #{multitask_bn.2} parent=0 // pred_check_branch
    %68 = sbr.rel (0) target = $region13
  $region12: #{multitask_bn.2} parent=0 // pred_region
    _
  $region13: #{multitask_bn.2} parent=0 // pred_fallthru
    _
  // Predicated region
  $region14: #{multitask_bn.2} parent=0 // pred_check
    _
  $region15: #{multitask_bn.2} parent=0 // pred_check_branch
    %70 = sbr.rel (0) target = $region17
  $region16: #{multitask_bn.2} parent=0 // pred_region
    _
  $region17: #{multitask_bn.2} parent=0 // pred_fallthru
    _
  // Predicated region
  $region18: #{multitask_bn.2} parent=0 // pred_check
    _
  $region19: #{multitask_bn.2} parent=0 // pred_check_branch
    %72 = sbr.rel (0) target = $region21
  $region20: #{multitask_bn.2} parent=0 // pred_region
    _
  $region21: #{multitask_bn.2} parent=0 // pred_fallthru
    _
  // Predicated region
  $region22: #{multitask_bn.2} parent=0 // pred_check
    _
  $region23: #{multitask_bn.2} parent=0 // pred_check_branch
    %74 = sbr.rel (0) target = $region25
  $region24: #{multitask_bn.2} parent=0 // pred_region
    _
  $region25: #{multitask_bn.2} parent=0 // pred_fallthru
    _

// kernel: multitask_bn.3
$region0: #{multitask_bn.3}
  #allocation0 [shape = 'u32[]', space=smem, size = 0x4, offset = 0x4, fixed_abs, tag = 'smem constant byte address 0x4 - core index']
  #allocation1 [shape = 'u32[144,128]{1,0:T(1,128)}', space=vmem, size = 0x12000, scoped, tag = 'internal scratch']
  %s0 = inlined_call_operand.vmem [shape: f32[2,4,256], index: 0, kind: input, shape index: {}]
  %s1 = inlined_call_operand.vmem [shape: f32[1,4,1], index: 1, kind: input, shape index: {}]
  %s2 = inlined_call_operand.vmem [shape: f32[1,4,1], index: 2, kind: input, shape index: {}]
  %s3 = inlined_call_operand.vmem [shape: f32[2,4,256], index: 3, kind: output, shape index: {}]
  %s4 = sld [smem:[#allocation0]]
  $region22: #{multitask_bn.3} parent=0
    _
  %s6 = ssub.s32 1, %s4
  %s7 = scalar_select 0, %s6, %s4
  // Predicated region
  $region2: #{multitask_bn.3} parent=0 // pred_check
    _
  $region3: #{multitask_bn.3} parent=0 // pred_check_branch
    %9 = sbr.rel (0) target = $region5
  $region4: #{multitask_bn.3} parent=0 // pred_region
    _
  $region5: #{multitask_bn.3} parent=0 // pred_fallthru
    _
  // Predicated region
  $region6: #{multitask_bn.3} parent=0 // pred_check
    _
  $region7: #{multitask_bn.3} parent=0 // pred_check_branch
    %11 = sbr.rel (0) target = $region9
  $region8: #{multitask_bn.3} parent=0 // pred_region
    _
  $region9: #{multitask_bn.3} parent=0 // pred_fallthru
    _
  // Predicated region
  $region10: #{multitask_bn.3} parent=0 // pred_check
    _
  $region11: #{multitask_bn.3} parent=0 // pred_check_branch
    %13 = sbr.rel (0) target = $region13
  $region12: #{multitask_bn.3} parent=0 // pred_region
    _
  $region13: #{multitask_bn.3} parent=0 // pred_fallthru
    _
  %v14 = vld [vmem:[%s0] sm:$0xff]
  %v15 = vld [vmem:[%s0 + $0x8] sm:$0xff]
  %v16 = vld [vmem:[%s1] sm:$0xf]
  %18 = vset.pattern.permute.xlu0 0
  %19 = vperm.xlu0 %18, %v16
  %v20 = vpop.permute.xlu0 %19
  %v22 = vunpack.c.l.s4 839922192
  %v23 = vunpack.c.0.s8 %v22
  %v24 = vlaneseq
  %v25 = vshrl.u32 %v24, 7
  %v26 = vsub.s32 %v23, %v25
  %v27 = vrot.slane %v20, %v26
  %v29 = vmul.f32 %v14, %v27
  %v30 = vmul.f32 %v15, %v27
  %v31 = vld [vmem:[%s2] sm:$0xf]
  %33 = vset.pattern.permute.xlu0 0
  %34 = vperm.xlu0 %33, %v31
  %v35 = vpop.permute.xlu0 %34
  %v37 = vunpack.c.l.s4 839922192
  %v38 = vunpack.c.0.s8 %v37
  %v39 = vlaneseq
  %v40 = vshrl.u32 %v39, 7
  %v41 = vsub.s32 %v38, %v40
  %v42 = vrot.slane %v35, %v41
  %v44 = vadd.f32 %v29, %v42
  %v45 = vadd.f32 %v30, %v42
  %46 = vst [vmem:[%s3] sm:$0xff] %v44
  %47 = vst [vmem:[%s3 + $0x8] sm:$0xff] %v45
  // Predicated region
  $region14: #{multitask_bn.3} parent=0 // pred_check
    _
  $region15: #{multitask_bn.3} parent=0 // pred_check_branch
    %49 = sbr.rel (0) target = $region17
  $region16: #{multitask_bn.3} parent=0 // pred_region
    _
  $region17: #{multitask_bn.3} parent=0 // pred_fallthru
    _
  // Predicated region
  $region18: #{multitask_bn.3} parent=0 // pred_check
    _
  $region19: #{multitask_bn.3} parent=0 // pred_check_branch
    %51 = sbr.rel (0) target = $region21
  $region20: #{multitask_bn.3} parent=0 // pred_region
    _
  $region21: #{multitask_bn.3} parent=0 // pred_fallthru
    _

</llo_original>
